<compile_context>
chip_gen: v7x
topology: tpu7x:2x2x1
jax: 0.10.0
libtpu: 0.0.40
codegen_flags: <defaults>
</compile_context>

<pallas_src>
import jax
import jax.numpy as jnp
from jax.experimental import pallas as pl
from jax.experimental.pallas import tpu as pltpu


_VMEM_LIMIT_BYTES = 32 << 20                 # scoped cap; safe on v7x's 64 MiB
_VMEM_TILE_BUDGET = (3 * _VMEM_LIMIT_BYTES) // 4


def _round_up(x, m):
    return (x + m - 1) // m * m


def _pooler_kernel(x_ref, w_ref, b_ref, o_ref):
    # x_ref: (tm, h_in)   first-token activation rows
    # w_ref: (h_in, tn)   pre-transposed (in, out) weight tile -> plain matmul
    # b_ref: (1, tn)      bias tile (re-fetched only when the n index changes)
    # o_ref: (tm, tn)     output tile
    x = x_ref[...]
    w = w_ref[...]
    if x.dtype != w.dtype:
        # bf16 performance path: cast activations in-VMEM (no extra HBM
        # traffic) so the MXU runs its fast bf16 pipeline; accumulate in f32.
        x = x.astype(w.dtype)
    y = jnp.dot(x, w, preferred_element_type=jnp.float32)
    y = y + b_ref[...].astype(jnp.float32)
    o_ref[...] = jnp.tanh(y).astype(o_ref.dtype)


def prepare_bert_pooler_params(weight, bias, *, compute_dtype=jnp.bfloat16):
    """One-time (model-load) parameter preparation.

    * Transpose the PyTorch (out, in) weight to (in, out) so the kernel does a
      plain A @ B contraction (no per-step transpose).
    * Pad to (8, 128)-aligned shapes once — never per call.
    * Cast the weight to `compute_dtype` (bf16 by default: halves the HBM
      weight read that dominates this memory-bound kernel; pass None to keep
      exact f32 semantics).  The bias stays f32 (negligible bytes, exact add).
    """
    h_out_raw, h_in_raw = weight.shape
    assert bias.shape == (h_out_raw,)
    h_in = _round_up(h_in_raw, 128)
    h_out = _round_up(h_out_raw, 128)

    w_t = weight.T                                     # (in, out) layout
    if (h_in, h_out) != (h_in_raw, h_out_raw):
        w_t = jnp.pad(w_t, ((0, h_in - h_in_raw), (0, h_out - h_out_raw)))
        bias = jnp.pad(bias, ((0, h_out - h_out_raw),))
    if compute_dtype is not None:
        w_t = w_t.astype(compute_dtype)
    return w_t, bias.reshape(1, h_out).astype(jnp.float32)


def _choose_tiles(b_eff, h_in, h_out, x_itemsize, w_itemsize, out_itemsize):
    """Pick the biggest (tm, tn) fitting the VMEM budget (fewest grid steps),
    then ensure >= 2 tiles along a parallel axis so v7x's two TensorCores both
    get work (no-op cost on 1-TC v5e/v6e)."""
    # tn candidates: lane-multiple divisors of h_out, descending -> no partial
    # N tiles and lane-dense output stores.
    tn_cands = [c for c in range(h_out, 127, -128) if h_out % c == 0]
    tm = b_eff if b_eff <= 512 else 512

    def vmem_need(tm_, tn_):
        return (2 * tm_ * h_in * x_itemsize        # x tile, double-buffered
                + 2 * tn_ * h_in * w_itemsize      # weight tile, double-buffered
                + 2 * tm_ * tn_ * out_itemsize     # output tile, double-buffered
                + 2 * tn_ * 4                      # bias tile
                + tm_ * tn_ * 4)                   # f32 pre-activation values

    tn = tn_cands[-1]
    for cand in tn_cands:
        if vmem_need(tm, cand) <= _VMEM_TILE_BUDGET:
            tn = cand
            break
    while vmem_need(tm, tn) > _VMEM_TILE_BUDGET and tm > 8:
        tm = max(8, _round_up(tm // 2, 8))

    if pl.cdiv(b_eff, tm) == 1 and pl.cdiv(h_out, tn) == 1:
        smaller = [c for c in tn_cands if c < tn]
        if smaller:
            tn = smaller[0]     # e.g. h_out -> h_out/2: one weight half per TC
    return tm, tn


def bert_pooler(hidden_states, w_prepared, b_prepared):
    """hidden_states: (B, S, H); (w_prepared, b_prepared) from
    prepare_bert_pooler_params.  Returns tanh(hidden_states[:, 0] @ W.T + b)."""
    B, S, H = hidden_states.shape
    h_in, h_out = w_prepared.shape
    assert h_in == _round_up(H, 128) and b_prepared.shape == (1, h_out)
    out_dtype = hidden_states.dtype

    if H == h_in:
        # Aligned production path: contiguous reshape is metadata-only; the x
        # BlockSpec reads only columns [0, H) of each row == token 0.
        x2 = hidden_states.reshape(B, S * H)
        b_eff = B
        trim = False
    else:
        # Unaligned toy path: pad only the tiny (B, H) token-0 slice per call
        # (the weight/bias were padded once at prepare time).
        b_eff = _round_up(B, 8)
        x2 = jnp.pad(hidden_states[:, 0, :], ((0, b_eff - B), (0, h_in - H)))
        trim = True

    x_bytes = jnp.dtype(x2.dtype).itemsize
    w_bytes = jnp.dtype(w_prepared.dtype).itemsize
    o_bytes = jnp.dtype(out_dtype).itemsize

    tm, tn = _choose_tiles(b_eff, h_in, h_out, x_bytes, w_bytes, o_bytes)
    n_tiles = pl.cdiv(h_out, tn)
    m_tiles = pl.cdiv(b_eff, tm)
    grid = (n_tiles, m_tiles)   # weight index on the OUTER axis: DMA'd once

    out = pl.pallas_call(
        _pooler_kernel,
        out_shape=jax.ShapeDtypeStruct((b_eff, h_out), out_dtype),
        grid_spec=pltpu.PrefetchScalarGridSpec(
            num_scalar_prefetch=0,
            grid=grid,
            in_specs=[
                pl.BlockSpec((tm, h_in), lambda n, m: (m, 0)),   # token-0 rows
                pl.BlockSpec((h_in, tn), lambda n, m: (0, n)),   # (in,out) weight
                pl.BlockSpec((1, tn), lambda n, m: (0, n)),      # bias tile
            ],
            out_specs=pl.BlockSpec((tm, tn), lambda n, m: (m, n)),
        ),
        compiler_params=pltpu.CompilerParams(
            dimension_semantics=("parallel", "parallel"),
            vmem_limit_bytes=_VMEM_LIMIT_BYTES,
        ),
        cost_estimate=pl.CostEstimate(
            flops=2 * b_eff * h_in * h_out,
            transcendentals=b_eff * h_out,
            bytes_accessed=(h_in * h_out * w_bytes              # weight read once
                            + n_tiles * b_eff * h_in * x_bytes  # x read per n tile
                            + b_eff * h_out * o_bytes           # output written
                            + h_out * 4),                       # bias
        ),
    )(x2, w_prepared, b_prepared)

    if trim:
        out = out[:B, :H]
    return out


if __name__ == "__main__":
    key = jax.random.PRNGKey(0)

    def run_case(tag, B, S, H, compute_dtype, atol, rtol):
        k = jax.random.fold_in(key, tag)
        kx, kw, kb = jax.random.split(k, 3)
        hidden_states = jax.random.normal(kx, (B, S, H), dtype=jnp.float32)
        # Deterministic Linear(H, H) params (nn.Linear-style uniform bounds).
        bound = 1.0 / (H ** 0.5)
        weight = jax.random.uniform(kw, (H, H), jnp.float32, -bound, bound)  # (out, in)
        bias = jax.random.uniform(kb, (H,), jnp.float32, -bound, bound)

        # One-time model-load prep (transpose / pad / optional bf16 cast).
        w_prep, b_prep = prepare_bert_pooler_params(
            weight, bias, compute_dtype=compute_dtype)

        out = jax.block_until_ready(bert_pooler(hidden_states, w_prep, b_prep))

        ref = jnp.tanh(hidden_states[:, 0, :] @ weight.T + bias)
        assert out.shape == (B, H)
        assert jnp.allclose(out, ref, atol=atol, rtol=rtol), \
            f"mismatch vs reference {(B, S, H, compute_dtype)}"

    # f32 exact paths (tight tolerance)
    run_case(1, 2, 8, 32, None, 1e-5, 1e-5)      # toy unaligned -> padded-at-prep path
    run_case(2, 8, 4, 256, None, 1e-5, 1e-5)     # aligned; megacore split -> (2, 1) grid
    run_case(3, 256, 2, 384, None, 1e-5, 1e-5)   # aligned; (3, 1) grid of tiles
    # bf16-weight performance path (looser tolerance vs the f32 reference)
    run_case(4, 64, 4, 256, jnp.bfloat16, 3e-2, 3e-2)

    print("KERNEL_OK")
</pallas_src>

<mosaic_0001>
module attributes {stable_mosaic.version = 11 : i64} {
  func.func @_pooler_kernel(%arg0: i32, %arg1: i32, %arg2: memref<8x128xf32, #tpu.memory_space<vmem>>, %arg3: memref<128x128xf32, #tpu.memory_space<vmem>>, %arg4: memref<1x128xf32, #tpu.memory_space<vmem>>, %arg5: memref<8x128xf32, #tpu.memory_space<vmem>>) attributes {dimension_semantics = [#tpu.dimension_semantics<parallel>, #tpu.dimension_semantics<parallel>], iteration_bounds = array<i64: 1, 1>, scalar_prefetch = 0 : i64, scratch_operands = 0 : i64, tpu.core_type = #tpu.core_type<tc>, window_params = [{transform_indices = @transform_0, window_bounds = array<i64: 8, 128>}, {transform_indices = @transform_1, window_bounds = array<i64: 128, 128>}, {transform_indices = @transform_2, window_bounds = array<i64: 1, 128>}, {transform_indices = @transform_3, window_bounds = array<i64: 8, 128>}]} {
    %c0 = arith.constant 0 : index
    %c0_0 = arith.constant 0 : index
    %0 = vector.load %arg2[%c0, %c0_0] : memref<8x128xf32, #tpu.memory_space<vmem>>, vector<8x128xf32>
    %c0_1 = arith.constant 0 : index
    %c0_2 = arith.constant 0 : index
    %1 = vector.load %arg3[%c0_1, %c0_2] : memref<128x128xf32, #tpu.memory_space<vmem>>, vector<128x128xf32>
    %cst = arith.constant dense<0.000000e+00> : vector<8x128xf32>
    %2 = tpu.matmul %0, %1, %cst {dimension_numbers = #tpu.dot_dimension_numbers<[1], [0], [0], [1], [0, 0, 1, 1], [], []>} : vector<8x128xf32>, vector<128x128xf32>, vector<8x128xf32> -> vector<8x128xf32>
    %c0_3 = arith.constant 0 : index
    %c0_4 = arith.constant 0 : index
    %3 = vector.load %arg4[%c0_3, %c0_4] : memref<1x128xf32, #tpu.memory_space<vmem>>, vector<1x128xf32>
    %4 = vector.broadcast %3 : vector<1x128xf32> to vector<8x128xf32>
    %5 = arith.addf %2, %4 : vector<8x128xf32>
    %6 = math.tanh %5 : vector<8x128xf32>
    %c0_5 = arith.constant 0 : index
    %c0_6 = arith.constant 0 : index
    %7 = vector.load %arg5[%c0_5, %c0_6] : memref<8x128xf32, #tpu.memory_space<vmem>>, vector<8x128xf32>
    tpu.vector_store %arg5[%c0_5, %c0_6], %6 {strides = array<i32>} : memref<8x128xf32, #tpu.memory_space<vmem>>, vector<8x128xf32>,
    return
  }
  func.func @transform_0(%arg0: i32, %arg1: i32) -> (i32, i32) {
    %c0_i32 = arith.constant 0 : i32
    %c0_i32_0 = arith.constant 0 : i32
    return %arg1, %c0_i32 : i32, i32
  }
  func.func @transform_1(%arg0: i32, %arg1: i32) -> (i32, i32) {
    %c0_i32 = arith.constant 0 : i32
    %c0_i32_0 = arith.constant 0 : i32
    return %c0_i32, %arg0 : i32, i32
  }
  func.func @transform_2(%arg0: i32, %arg1: i32) -> (i32, i32) {
    %c0_i32 = arith.constant 0 : i32
    %c0_i32_0 = arith.constant 0 : i32
    return %c0_i32, %arg0 : i32, i32
  }
  func.func @transform_3(%arg0: i32, %arg1: i32) -> (i32, i32) {
    %c0_i32 = arith.constant 0 : i32
    return %arg1, %arg0 : i32, i32
  }
}

</mosaic_0001>

<llo_original>
// kernel: tpu_custom_call.1
$region0: #{tpu_custom_call.1}
  #allocation0 [shape = 'u32[]', space=smem, size = 0x4, offset = 0x4, fixed_abs, tag = 'smem constant byte address 0x4 - core index']
  #allocation1 [shape = 'u32[144,128]{1,0:T(1,128)}', space=vmem, size = 0x12000, scoped, tag = 'internal scratch']
  %s0 = inlined_call_operand.hbm [shape: f32[8,128], index: 0, kind: input, shape index: {}]
  %s1 = inlined_call_operand.hbm [shape: f32[128,128], index: 1, kind: input, shape index: {}]
  %s2 = inlined_call_operand.vmem [shape: f32[1,128], index: 2, kind: input, shape index: {}]
  %s3 = inlined_call_operand.hbm [shape: f32[8,128], index: 3, kind: output, shape index: {}]
  %s4 = sld [smem:[#allocation0]]
  $region30: #{tpu_custom_call.1} parent=0
    _
  %s6 = ssub.s32 1, %s4
  %s7 = scalar_select 0, %s6, %s4
  $region1: #{tpu_custom_call.1} parent=0
    #allocation2 [shape = 'u8[4096]{0}', space=vmem, size = 0x1000, scoped, tag = 'input window, operand 0, single buffered']
    #allocation3 [shape = 's32[1]{0}', space=sflag, size = 0x4, scoped, tag = 'scoped memory for tpu_custom_call.1']
    #allocation4 [shape = 's32[1]{0}', space=sflag, size = 0x4, scoped, tag = 'scoped memory for tpu_custom_call.1']
    #allocation5 [shape = 'u8[65536]{0}', space=vmem, size = 0x10000, scoped, tag = 'input window, operand 1, single buffered']
    #allocation6 [shape = 's32[1]{0}', space=sflag, size = 0x4, scoped, tag = 'scoped memory for tpu_custom_call.1']
    #allocation7 [shape = 'u8[4096]{0}', space=vmem, size = 0x1000, scoped, tag = 'output window, operand 0, single buffered']
    %8 = vsyncpa [#allocation3], 0
    %9 = vsyncpa [#allocation6], 0
    %10 = vsyncpa [#allocation4], 0
    // Predicated region
    $region2: #{tpu_custom_call.1} parent=1 // pred_check
      _
    $region3: #{tpu_custom_call.1} parent=1 // pred_check_branch
      %12 = sbr.rel (0) target = $region5
    $region4: #{tpu_custom_call.1} parent=1 // pred_region
      %s14 = ssub.s32 128, 128
      %15 = vsyncadd [#allocation3], %s14
      %s17 = sshll.u32 [#allocation2], 4
      %s18 = int_to_ptr.vmem [resolvable:$true] %s17
      %20 = dma.hbm_to_vmem [thread:$0]  %s0, 128, %s18, [#allocation3]
    $region5: #{tpu_custom_call.1} parent=1 // pred_fallthru
      _
    // Predicated region
    $region6: #{tpu_custom_call.1} parent=1 // pred_check
      _
    $region7: #{tpu_custom_call.1} parent=1 // pred_check_branch
      %22 = sbr.rel (0) target = $region9
    $region8: #{tpu_custom_call.1} parent=1 // pred_region
      %s24 = ssub.s32 2048, 2048
      %25 = vsyncadd [#allocation6], %s24
      %s26 = sshll.u32 [#allocation5], 4
      %s27 = int_to_ptr.vmem [resolvable:$true] %s26
      %32 = dma.hbm_to_vmem [thread:$0]  %s1, 2048, %s27, [#allocation6], 128, 128, 8
    $region9: #{tpu_custom_call.1} parent=1 // pred_fallthru
      _
    // Predicated region
    $region10: #{tpu_custom_call.1} parent=1 // pred_check
      _
    $region11: #{tpu_custom_call.1} parent=1 // pred_check_branch
      %34 = sbr.rel (0) target = $region13
    $region12: #{tpu_custom_call.1} parent=1 // pred_region
      _
    $region13: #{tpu_custom_call.1} parent=1 // pred_fallthru
      _
    // Predicated region
    $region14: #{tpu_custom_call.1} parent=1 // pred_check
      _
    $region15: #{tpu_custom_call.1} parent=1 // pred_check_branch
      %36 = sbr.rel (0) target = $region17
    $region16: #{tpu_custom_call.1} parent=1 // pred_region
      %37 = dma.done [#allocation3], 128
    $region17: #{tpu_custom_call.1} parent=1 // pred_fallthru
      _
    // Predicated region
    $region18: #{tpu_custom_call.1} parent=1 // pred_check
      _
    $region19: #{tpu_custom_call.1} parent=1 // pred_check_branch
      %39 = sbr.rel (0) target = $region21
    $region20: #{tpu_custom_call.1} parent=1 // pred_region
      %40 = dma.done [#allocation6], 2048
    $region21: #{tpu_custom_call.1} parent=1 // pred_fallthru
      _
    %v41 = vld [vmem:[#allocation2] sm:$0xff]
    %v42 = vld [vmem:[#allocation5] sm:$0xff]
    %v43 = vld [vmem:[#allocation5 + $0x8] sm:$0xff]
    %v44 = vld [vmem:[#allocation5 + $0x10] sm:$0xff]
    %v45 = vld [vmem:[#allocation5 + $0x18] sm:$0xff]
    %v46 = vld [vmem:[#allocation5 + $0x20] sm:$0xff]
    %v47 = vld [vmem:[#allocation5 + $0x28] sm:$0xff]
    %v48 = vld [vmem:[#allocation5 + $0x30] sm:$0xff]
    %v49 = vld [vmem:[#allocation5 + $0x38] sm:$0xff]
    %v50 = vld [vmem:[#allocation5 + $0x40] sm:$0xff]
    %v51 = vld [vmem:[#allocation5 + $0x48] sm:$0xff]
    %v52 = vld [vmem:[#allocation5 + $0x50] sm:$0xff]
    %v53 = vld [vmem:[#allocation5 + $0x58] sm:$0xff]
    %v54 = vld [vmem:[#allocation5 + $0x60] sm:$0xff]
    %v55 = vld [vmem:[#allocation5 + $0x68] sm:$0xff]
    %v56 = vld [vmem:[#allocation5 + $0x70] sm:$0xff]
    %v57 = vld [vmem:[#allocation5 + $0x78] sm:$0xff]
    %v58 = vld [vmem:[%s2] sm:$0x1]
    %v60 = vlaneseq
    %v61 = vshrl.u32 %v60, 7
    %v62 = vsub.s32 0, %v61
    %v63 = vrot.slane %v58, %v62
    %65 = vmatprep.subr.mxu0 0.0
    %66 = vmatpush1.msra.mxu0 %v42
    %67 = vmatprep.subr.mxu0 0.0
    %68 = vmatpush1.msra.mxu0 %v43
    %69 = vmatprep.subr.mxu0 0.0
    %70 = vmatpush1.msra.mxu0 %v44
    %71 = vmatprep.subr.mxu0 0.0
    %72 = vmatpush1.msra.mxu0 %v45
    %73 = vmatprep.subr.mxu0 0.0
    %74 = vmatpush1.msra.mxu0 %v46
    %75 = vmatprep.subr.mxu0 0.0
    %76 = vmatpush1.msra.mxu0 %v47
    %77 = vmatprep.subr.mxu0 0.0
    %78 = vmatpush1.msra.mxu0 %v48
    %79 = vmatprep.subr.mxu0 0.0
    %80 = vmatpush1.msra.mxu0 %v49
    %81 = vmatprep.subr.mxu0 0.0
    %82 = vmatpush1.msra.mxu0 %v50
    %83 = vmatprep.subr.mxu0 0.0
    %84 = vmatpush1.msra.mxu0 %v51
    %85 = vmatprep.subr.mxu0 0.0
    %86 = vmatpush1.msra.mxu0 %v52
    %87 = vmatprep.subr.mxu0 0.0
    %88 = vmatpush1.msra.mxu0 %v53
    %89 = vmatprep.subr.mxu0 0.0
    %90 = vmatpush1.msra.mxu0 %v54
    %91 = vmatprep.subr.mxu0 0.0
    %92 = vmatpush1.msra.mxu0 %v55
    %93 = vmatprep.subr.mxu0 0.0
    %94 = vmatpush1.msra.mxu0 %v56
    %95 = vmatprep.subr.mxu0 0.0
    %96 = vmatpush1.msra.mxu0 %v57
    %97 = vmatprep.subr.mxu0 0.0
    %98 = vmatpush1.msra.mxu0 0.0
    %99 = vmatprep.subr.mxu0 0.0
    %100 = vmatpush1.msra.mxu0 0.0
    %101 = vmatprep.subr.mxu0 0.0
    %102 = vmatpush1.msra.mxu0 0.0
    %103 = vmatprep.subr.mxu0 0.0
    %104 = vmatpush1.msra.mxu0 0.0
    %105 = vmatprep.subr.mxu0 0.0
    %106 = vmatpush1.msra.mxu0 0.0
    %107 = vmatprep.subr.mxu0 0.0
    %108 = vmatpush1.msra.mxu0 0.0
    %109 = vmatprep.subr.mxu0 0.0
    %110 = vmatpush1.msra.mxu0 0.0
    %111 = vmatprep.subr.mxu0 0.0
    %112 = vmatpush1.msra.mxu0 0.0
    %113 = vmatprep.subr.mxu0 0.0
    %114 = vmatpush1.msra.mxu0 0.0
    %115 = vmatprep.subr.mxu0 0.0
    %116 = vmatpush1.msra.mxu0 0.0
    %117 = vmatprep.subr.mxu0 0.0
    %118 = vmatpush1.msra.mxu0 0.0
    %119 = vmatprep.subr.mxu0 0.0
    %120 = vmatpush1.msra.mxu0 0.0
    %121 = vmatprep.subr.mxu0 0.0
    %122 = vmatpush1.msra.mxu0 0.0
    %123 = vmatprep.subr.mxu0 0.0
    %124 = vmatpush1.msra.mxu0 0.0
    %125 = vmatprep.subr.mxu0 0.0
    %126 = vmatpush1.msra.mxu0 0.0
    %127 = vmatprep.subr.mxu0 0.0
    %128 = vmatpush1.msra.mxu0 0.0
    %129 = vmatprep.mubr.f32.mxu0 0.0
    %130 = vmatmul.mubr.f32.gmra.mrb[0].mxu0 %v41
    %v131 = vpop.f32.mrb[0].mxu0
    %v132 = vadd.f32 %v63, %v131
    %v133 = vpop.f32.mrb[0].mxu0
    %134 = vdwg.mxu0
    %v135 = vtanh.pop %v132
    %136 = vst [vmem:[#allocation7] sm:$0xff] %v135
    // Predicated region
    $region22: #{tpu_custom_call.1} parent=1 // pred_check
      _
    $region23: #{tpu_custom_call.1} parent=1 // pred_check_branch
      %138 = sbr.rel (0) target = $region25
    $region24: #{tpu_custom_call.1} parent=1 // pred_region
      %s140 = ssub.s32 128, 128
      %141 = vsyncadd [#allocation4], %s140
      %s143 = sshll.u32 [#allocation7], 4
      %s144 = int_to_ptr.vmem [resolvable:$true] %s143
      %146 = dma.vmem_to_hbm [thread:$0]  %s144, 128, %s3, [#allocation4]
    $region25: #{tpu_custom_call.1} parent=1 // pred_fallthru
      _
    // Predicated region
    $region26: #{tpu_custom_call.1} parent=1 // pred_check
      _
    $region27: #{tpu_custom_call.1} parent=1 // pred_check_branch
      %148 = sbr.rel (0) target = $region29
    $region28: #{tpu_custom_call.1} parent=1 // pred_region
      %149 = dma.done [#allocation4], 128
    $region29: #{tpu_custom_call.1} parent=1 // pred_fallthru
      _
    %150 = vsyncpa [#allocation3], 1
    %151 = vsyncpa [#allocation6], 1
    %152 = vsyncpa [#allocation4], 1

</llo_original>
